<compile_context>
chip_gen: v7x
topology: tpu7x:2x2x1
jax: 0.10.0
libtpu: 0.0.40
codegen_flags: <defaults>
</compile_context>

<pallas_src>
import functools
import math
import numpy as np

import jax
import jax.numpy as jnp
from jax import lax
from jax.experimental import pallas as pl
from jax.experimental.pallas import tpu as pltpu


_WEIGHTS = (0.0448, 0.2856, 0.3001, 0.2363, 0.1333)
_LEVELS = len(_WEIGHTS)
_C1 = (0.01 * 1.0) ** 2
_C2 = (0.03 * 1.0) ** 2


def gaussian_window_1d(window_size: int, sigma: float) -> np.ndarray:
    # Faithful to the reference module (POSITIVE exponent -- an upstream bug we
    # deliberately preserve), normalized to sum to 1.
    k = np.array(
        [math.exp((x - window_size // 2) ** 2 / (2.0 * sigma ** 2))
         for x in range(window_size)],
        dtype=np.float64,
    )
    return k / k.sum()


def _band_matrix(size: int, g: np.ndarray) -> np.ndarray:
    # A[i, j] = g[j - i + pad] inside the band, 0 outside: applying A along an
    # axis == 'SAME' 1-D correlation with zero padding folded in. A symmetric.
    w = g.shape[0]
    pad = w // 2
    a = np.zeros((size, size), dtype=np.float64)
    for i in range(size):
        for j in range(size):
            d = j - i + pad
            if 0 <= d < w:
                a[i, j] = g[d]
    return a


def _pool_matrix(size: int) -> np.ndarray:
    # P[i, 2i] = P[i, 2i+1] = 0.5  ->  P @ x @ P^T == F.avg_pool2d(x, (2, 2)).
    out = size // 2
    p = np.zeros((out, size), dtype=np.float64)
    for i in range(out):
        p[i, 2 * i] = 0.5
        p[i, 2 * i + 1] = 0.5
    return p


def _build_plan(H: int, W: int, window_size: int):
    """Per-level conv / pool operators (flattened over row-major (h, w))."""
    g = gaussian_window_1d(window_size, 1.5)
    sizes = [(H // (2 ** l), W // (2 ** l)) for l in range(_LEVELS)]

    conv_ops = []   # ("matmul", mat_index) or ("scalar", python_float)
    pool_ops = []   # ("matmul", mat_index) or ("mean", 0.25)
    mats = []       # float64 numpy matrices (cast to bf16 at upload time)

    for (h, w) in sizes:
        ah = _band_matrix(h, g)
        aw = _band_matrix(w, g)
        if h * w == 1:
            # 1x1 image: only the centre tap is in-bounds -> scalar scale.
            conv_ops.append(("scalar", float(ah[0, 0] * aw[0, 0])))
        else:
            conv_ops.append(("matmul", len(mats)))
            # out_flat = x_flat @ kron(A_h, A_w)   (operator is symmetric)
            mats.append(np.kron(ah, aw))

    for l in range(_LEVELS - 1):
        h, w = sizes[l]
        h2, w2 = sizes[l + 1]
        if h2 * w2 == 1:
            assert h == 2 and w == 2
            pool_ops.append(("mean", 0.25))
        else:
            pool_ops.append(("matmul", len(mats)))
            # pooled_flat = x_flat @ kron(P_h, P_w)^T
            mats.append(np.kron(_pool_matrix(h), _pool_matrix(w)).T)

    return conv_ops, pool_ops, mats


def _make_mssim_kernel(conv_ops, pool_ops, bc: int, bc_pad: int, weights):
    levels = len(conv_ops)

    def kernel(*refs):
        xpair_ref = refs[0]
        mat_refs = refs[1:-1]
        loss_ref = refs[-1]

        xpair = xpair_ref[...]              # (2*bc_pad, H*W) f32 lane-dense slab

        cs_means = []
        ssim_means = []
        for lvl in range(levels):
            n = xpair.shape[1]
            x1 = xpair[:bc_pad]             # tile-aligned views (bc_pad % 8 == 0)
            x2 = xpair[bc_pad:]

            kind, op = conv_ops[lvl]
            if kind == "scalar":
                # 1x1 level: conv degenerates to a scalar scale (f32 path).
                mu1 = x1 * op
                mu2 = x2 * op
                e11 = (x1 * x1) * op
                e22 = (x2 * x2) * op
                e12 = (x1 * x2) * op
            else:
                kmat = mat_refs[op][...]    # (n, n) bf16 conv operator
                # One bf16 MXU matmul (f32 accumulate) for all 5 filtered maps.
                stacked = jnp.concatenate(
                    [xpair, x1 * x1, x2 * x2, x1 * x2], axis=0)  # (5*bc_pad, n)
                filt = jnp.dot(stacked.astype(jnp.bfloat16), kmat,
                               preferred_element_type=jnp.float32)
                mu1 = filt[0 * bc_pad:1 * bc_pad]
                mu2 = filt[1 * bc_pad:2 * bc_pad]
                e11 = filt[2 * bc_pad:3 * bc_pad]
                e22 = filt[3 * bc_pad:4 * bc_pad]
                e12 = filt[4 * bc_pad:5 * bc_pad]

            mu1_sq = mu1 * mu1
            mu2_sq = mu2 * mu2
            mu1_mu2 = mu1 * mu2
            sigma1_sq = e11 - mu1_sq
            sigma2_sq = e22 - mu2_sq
            sigma12 = e12 - mu1_mu2

            v1 = 2.0 * sigma12 + _C2
            v2 = sigma1_sq + sigma2_sq + _C2
            cs_map = v1 * pl.reciprocal(v2, approx=True)
            ssim_map = ((2.0 * mu1_mu2 + _C1)
                        * pl.reciprocal(mu1_sq + mu2_sq + _C1, approx=True)
                        * cs_map)

            # Mask the zero-pad rows (their cs/ssim value is ~1 and would bias
            # the mean); divide by the true element count.
            row = lax.broadcasted_iota(jnp.int32, (bc_pad, n), 0)
            mask = (row < bc).astype(jnp.float32)
            inv_cnt = 1.0 / float(bc * n)
            cs_means.append((jnp.sum(cs_map * mask) * inv_cnt).reshape(1, 1))
            ssim_means.append((jnp.sum(ssim_map * mask) * inv_cnt).reshape(1, 1))

            if lvl < levels - 1:
                pkind, pop = pool_ops[lvl]
                if pkind == "mean":
                    # 2x2 -> 1x1: plain mean.
                    xpair = pop * jnp.sum(xpair, axis=1, keepdims=True)
                else:
                    pmat = mat_refs[pop][...]          # (n, n_next) bf16
                    xpair = jnp.dot(xpair.astype(jnp.bfloat16), pmat,
                                    preferred_element_type=jnp.float32)

        # Final combine, faithful to the reference:
        #   output = prod(pow1[:-1] * pow2[-1])
        #          = (prod_{l<L-1} mcs_l ** w_l) * (mssim_{L-1} ** w_{L-1}) ** (L-1)
        def powf(v, e):
            return jnp.exp(e * jnp.log(v))

        out = powf(cs_means[0], weights[0])
        for lvl in range(1, levels - 1):
            out = out * powf(cs_means[lvl], weights[lvl])
        out = out * powf(ssim_means[levels - 1],
                         float(levels - 1) * weights[levels - 1])
        loss_ref[...] = 1.0 - out

    return kernel


@functools.lru_cache(maxsize=None)
def _get_mssim_fn(B: int, C: int, H: int, W: int, window_size: int):
    assert H == W and H % 16 == 0 and H * W <= 1024, (
        "fused MS-SSIM kernel supports square 16x16 or 32x32 inputs; larger "
        "images need the separable-conv + channel-tiled variant (see TODO).")

    bc = B * C
    bc_pad = max(8, ((bc + 7) // 8) * 8)     # sublane-aligned row count
    n0 = H * W

    conv_ops, pool_ops, mats = _build_plan(H, W, window_size)
    # Uploaded ONCE (cached); bf16 halves operator footprint / MXU passes.
    mat_arrays = [jnp.asarray(m, dtype=jnp.bfloat16) for m in mats]

    kernel = _make_mssim_kernel(conv_ops, pool_ops, bc, bc_pad, list(_WEIGHTS))

    call = pl.pallas_call(
        kernel,
        # Single invocation (no grid) + whole-array VMEM residency:
        # no pointless double-buffering of the operator matrices.
        in_specs=[pl.BlockSpec(memory_space=pltpu.MemorySpace.VMEM)]
        * (1 + len(mat_arrays)),
        out_specs=pl.BlockSpec(memory_space=pltpu.MemorySpace.VMEM),
        out_shape=jax.ShapeDtypeStruct((1, 1), jnp.float32),
    )

    def forward(img1, img2):
        x1 = img1.astype(jnp.float32).reshape(bc, n0)
        x2 = img2.astype(jnp.float32).reshape(bc, n0)
        pad = bc_pad - bc
        if pad:
            z = jnp.zeros((pad, n0), jnp.float32)
            x1 = jnp.concatenate([x1, z], axis=0)
            x2 = jnp.concatenate([x2, z], axis=0)
        xpair = jnp.concatenate([x1, x2], axis=0)   # (2*bc_pad, H*W) f32
        loss = call(xpair, *mat_arrays)
        return loss[0, 0]

    return jax.jit(forward)


def mssim_forward(img1, img2, in_channels: int = 3, window_size: int = 11,
                  size_average: bool = True):
    # TODO(synk): size_average=False (per-sample means) branch not implemented.
    del in_channels, size_average
    B, C, H, W = img1.shape
    return _get_mssim_fn(B, C, H, W, window_size)(img1, img2)


# ---------------------------------------------------------------------------
# Pure-JAX reference (shifted-slice separable conv, all-f32) for a sanity check.
# ---------------------------------------------------------------------------
def _mssim_reference(img1, img2, window_size: int = 11):
    g = jnp.asarray(gaussian_window_1d(window_size, 1.5), dtype=jnp.float32)
    pad = window_size // 2
    weights = jnp.asarray(_WEIGHTS, dtype=jnp.float32)

    def conv(x):
        B, C, H, W = x.shape
        xp = jnp.pad(x, ((0, 0), (0, 0), (pad, pad), (pad, pad)))
        t = sum(g[d] * xp[:, :, :, d:d + W] for d in range(window_size))
        return sum(g[d] * t[:, :, d:d + H, :] for d in range(window_size))

    def ssim(a, b):
        mu1, mu2 = conv(a), conv(b)
        mu1_sq, mu2_sq, mu1_mu2 = mu1 * mu1, mu2 * mu2, mu1 * mu2
        s1 = conv(a * a) - mu1_sq
        s2 = conv(b * b) - mu2_sq
        s12 = conv(a * b) - mu1_mu2
        v1 = 2.0 * s12 + _C2
        v2 = s1 + s2 + _C2
        cs = jnp.mean(v1 / v2)
        smap = (2.0 * mu1_mu2 + _C1) * v1 / ((mu1_sq + mu2_sq + _C1) * v2)
        return jnp.mean(smap), cs

    def pool(x):
        B, C, H, W = x.shape
        return x.reshape(B, C, H // 2, 2, W // 2, 2).mean(axis=(3, 5))

    a = img1.astype(jnp.float32)
    b = img2.astype(jnp.float32)
    mssim, mcs = [], []
    for lvl in range(_LEVELS):
        s, c = ssim(a, b)
        mssim.append(s)
        mcs.append(c)
        if lvl < _LEVELS - 1:
            a, b = pool(a), pool(b)
    mssim = jnp.stack(mssim)
    mcs = jnp.stack(mcs)
    pow1 = mcs ** weights
    pow2 = mssim ** weights
    return 1.0 - jnp.prod(pow1[:-1] * pow2[-1])


if __name__ == "__main__":
    key = jax.random.PRNGKey(0)
    k1, k2 = jax.random.split(key)
    # B=2, C=3 (module default in_channels), 16x16 spatial (survives the
    # 5-level /2 pyramid: 16, 8, 4, 2, 1).
    img1 = jax.random.uniform(k1, (2, 3, 16, 16), dtype=jnp.float32)
    noise = 0.05 * jax.random.normal(k2, (2, 3, 16, 16), dtype=jnp.float32)
    img2 = jnp.clip(img1 + noise, 0.0, 1.0)

    loss = jax.block_until_ready(
        mssim_forward(img1, img2, in_channels=3, window_size=11,
                      size_average=True))
    assert jnp.isfinite(loss), "MS-SSIM loss is not finite"

    # Second call exercises the cached/jitted fast path.
    loss2 = jax.block_until_ready(mssim_forward(img1, img2))
    assert jnp.allclose(loss, loss2)

    # Sanity check vs. an independent pure-JAX f32 implementation. Tolerance
    # absorbs bf16 MXU filtering + approx-reciprocal differences.
    ref = jax.block_until_ready(_mssim_reference(img1, img2))
    assert jnp.allclose(loss, ref, rtol=5e-2, atol=2e-2), (float(loss), float(ref))

    print("KERNEL_OK")
</pallas_src>

<mosaic_0001>
module attributes {stable_mosaic.version = 11 : i64} {
  func.func @kernel(%arg0: memref<16x256xf32, #tpu.memory_space<vmem>>, %arg1: memref<256x256xbf16, #tpu.memory_space<vmem>>, %arg2: memref<64x64xbf16, #tpu.memory_space<vmem>>, %arg3: memref<16x16xbf16, #tpu.memory_space<vmem>>, %arg4: memref<4x4xbf16, #tpu.memory_space<vmem>>, %arg5: memref<256x64xbf16, #tpu.memory_space<vmem>>, %arg6: memref<64x16xbf16, #tpu.memory_space<vmem>>, %arg7: memref<16x4xbf16, #tpu.memory_space<vmem>>, %arg8: memref<1x1xf32, #tpu.memory_space<vmem>>) attributes {dimension_semantics = [], scalar_prefetch = 0 : i64, scratch_operands = 0 : i64, tpu.core_type = #tpu.core_type<tc>} {
    %c0 = arith.constant 0 : index
    %c0_0 = arith.constant 0 : index
    %0 = vector.load %arg0[%c0, %c0_0] : memref<16x256xf32, #tpu.memory_space<vmem>>, vector<16x256xf32>
    %1 = vector.extract_strided_slice %0 {offsets = [0, 0], sizes = [8, 256], strides = [1, 1]} : vector<16x256xf32> to vector<8x256xf32>
    %2 = vector.extract_strided_slice %0 {offsets = [8, 0], sizes = [8, 256], strides = [1, 1]} : vector<16x256xf32> to vector<8x256xf32>
    %c0_1 = arith.constant 0 : index
    %c0_2 = arith.constant 0 : index
    %3 = vector.load %arg1[%c0_1, %c0_2] : memref<256x256xbf16, #tpu.memory_space<vmem>>, vector<256x256xbf16>
    %4 = arith.mulf %1, %1 : vector<8x256xf32>
    %5 = arith.mulf %2, %2 : vector<8x256xf32>
    %6 = arith.mulf %1, %2 : vector<8x256xf32>
    %7 = tpu.concatenate %0, %4, %5, %6 in 0 : vector<16x256xf32>, vector<8x256xf32>, vector<8x256xf32>, vector<8x256xf32> -> vector<40x256xf32>
    %8 = arith.truncf %7 : vector<40x256xf32> to vector<40x256xbf16>
    %cst = arith.constant dense<0.000000e+00> : vector<40x256xf32>
    %9 = tpu.matmul %8, %3, %cst {dimension_numbers = #tpu.dot_dimension_numbers<[1], [0], [0], [1], [0, 0, 1, 1], [], []>} : vector<40x256xbf16>, vector<256x256xbf16>, vector<40x256xf32> -> vector<40x256xf32>
    %10 = vector.extract_strided_slice %9 {offsets = [0, 0], sizes = [8, 256], strides = [1, 1]} : vector<40x256xf32> to vector<8x256xf32>
    %11 = vector.extract_strided_slice %9 {offsets = [8, 0], sizes = [8, 256], strides = [1, 1]} : vector<40x256xf32> to vector<8x256xf32>
    %12 = vector.extract_strided_slice %9 {offsets = [16, 0], sizes = [8, 256], strides = [1, 1]} : vector<40x256xf32> to vector<8x256xf32>
    %13 = vector.extract_strided_slice %9 {offsets = [24, 0], sizes = [8, 256], strides = [1, 1]} : vector<40x256xf32> to vector<8x256xf32>
    %14 = vector.extract_strided_slice %9 {offsets = [32, 0], sizes = [8, 256], strides = [1, 1]} : vector<40x256xf32> to vector<8x256xf32>
    %15 = arith.mulf %10, %10 : vector<8x256xf32>
    %16 = arith.mulf %11, %11 : vector<8x256xf32>
    %17 = arith.mulf %10, %11 : vector<8x256xf32>
    %18 = arith.subf %12, %15 : vector<8x256xf32>
    %19 = arith.subf %13, %16 : vector<8x256xf32>
    %20 = arith.subf %14, %17 : vector<8x256xf32>
    %cst_3 = arith.constant 2.000000e+00 : f32
    %21 = vector.broadcast %cst_3 : f32 to vector<8x256xf32>
    %22 = arith.mulf %21, %20 : vector<8x256xf32>
    %cst_4 = arith.constant 8.99999984E-4 : f32
    %23 = vector.broadcast %cst_4 : f32 to vector<8x256xf32>
    %24 = arith.addf %22, %23 : vector<8x256xf32>
    %25 = arith.addf %18, %19 : vector<8x256xf32>
    %cst_5 = arith.constant 8.99999984E-4 : f32
    %26 = vector.broadcast %cst_5 : f32 to vector<8x256xf32>
    %27 = arith.addf %25, %26 : vector<8x256xf32>
    %28 = tpu.reciprocal %27 {approx = true} : vector<8x256xf32> -> vector<8x256xf32>
    %29 = arith.mulf %24, %28 : vector<8x256xf32>
    %30 = tpu.iota {dimensions = array<i32: 0>} : vector<8x256xi32>
    %c6_i32 = arith.constant 6 : i32
    %31 = vector.broadcast %c6_i32 : i32 to vector<8x256xi32>
    %32 = arith.cmpi slt, %30, %31 : vector<8x256xi32>
    %33 = arith.extui %32 : vector<8x256xi1> to vector<8x256xi32>
    %34 = arith.sitofp %33 : vector<8x256xi32> to vector<8x256xf32>
    %35 = arith.mulf %29, %34 : vector<8x256xf32>
    %36 = vector.shape_cast %35 : vector<8x256xf32> to vector<1x8x256xf32>
    %cst_6 = arith.constant dense<0.000000e+00> : vector<1xf32>
    %37 = vector.multi_reduction <add>, %36, %cst_6 [1, 2] : vector<1x8x256xf32> to vector<1xf32>
    %38 = vector.shape_cast %37 : vector<1xf32> to vector<1x1x1xf32>
    %39 = vector.extract %38[0, 0, 0] : f32 from vector<1x1x1xf32>
    %cst_7 = arith.constant 6.51041686E-4 : f32
    %40 = arith.mulf %39, %cst_7 : f32
    %41 = vector.broadcast %40 : f32 to vector<1x1xf32>
    %c0_8 = arith.constant 0 : index
    %c0_9 = arith.constant 0 : index
    %42 = vector.load %arg5[%c0_8, %c0_9] : memref<256x64xbf16, #tpu.memory_space<vmem>>, vector<256x64xbf16>
    %43 = arith.truncf %0 : vector<16x256xf32> to vector<16x256xbf16>
    %cst_10 = arith.constant dense<0.000000e+00> : vector<16x64xf32>
    %44 = tpu.matmul %43, %42, %cst_10 {dimension_numbers = #tpu.dot_dimension_numbers<[1], [0], [0], [1], [0, 0, 1, 1], [], []>} : vector<16x256xbf16>, vector<256x64xbf16>, vector<16x64xf32> -> vector<16x64xf32>
    %45 = vector.extract_strided_slice %44 {offsets = [0, 0], sizes = [8, 64], strides = [1, 1]} : vector<16x64xf32> to vector<8x64xf32>
    %46 = vector.extract_strided_slice %44 {offsets = [8, 0], sizes = [8, 64], strides = [1, 1]} : vector<16x64xf32> to vector<8x64xf32>
    %c0_11 = arith.constant 0 : index
    %c0_12 = arith.constant 0 : index
    %47 = vector.load %arg2[%c0_11, %c0_12] : memref<64x64xbf16, #tpu.memory_space<vmem>>, vector<64x64xbf16>
    %48 = arith.mulf %45, %45 : vector<8x64xf32>
    %49 = arith.mulf %46, %46 : vector<8x64xf32>
    %50 = arith.mulf %45, %46 : vector<8x64xf32>
    %51 = tpu.concatenate %44, %48, %49, %50 in 0 : vector<16x64xf32>, vector<8x64xf32>, vector<8x64xf32>, vector<8x64xf32> -> vector<40x64xf32>
    %52 = arith.truncf %51 : vector<40x64xf32> to vector<40x64xbf16>
    %cst_13 = arith.constant dense<0.000000e+00> : vector<40x64xf32>
    %53 = tpu.matmul %52, %47, %cst_13 {dimension_numbers = #tpu.dot_dimension_numbers<[1], [0], [0], [1], [0, 0, 1, 1], [], []>} : vector<40x64xbf16>, vector<64x64xbf16>, vector<40x64xf32> -> vector<40x64xf32>
    %54 = vector.extract_strided_slice %53 {offsets = [0, 0], sizes = [8, 64], strides = [1, 1]} : vector<40x64xf32> to vector<8x64xf32>
    %55 = vector.extract_strided_slice %53 {offsets = [8, 0], sizes = [8, 64], strides = [1, 1]} : vector<40x64xf32> to vector<8x64xf32>
    %56 = vector.extract_strided_slice %53 {offsets = [16, 0], sizes = [8, 64], strides = [1, 1]} : vector<40x64xf32> to vector<8x64xf32>
    %57 = vector.extract_strided_slice %53 {offsets = [24, 0], sizes = [8, 64], strides = [1, 1]} : vector<40x64xf32> to vector<8x64xf32>
    %58 = vector.extract_strided_slice %53 {offsets = [32, 0], sizes = [8, 64], strides = [1, 1]} : vector<40x64xf32> to vector<8x64xf32>
    %59 = arith.mulf %54, %54 : vector<8x64xf32>
    %60 = arith.mulf %55, %55 : vector<8x64xf32>
    %61 = arith.mulf %54, %55 : vector<8x64xf32>
    %62 = arith.subf %56, %59 : vector<8x64xf32>
    %63 = arith.subf %57, %60 : vector<8x64xf32>
    %64 = arith.subf %58, %61 : vector<8x64xf32>
    %cst_14 = arith.constant 2.000000e+00 : f32
    %65 = vector.broadcast %cst_14 : f32 to vector<8x64xf32>
    %66 = arith.mulf %65, %64 : vector<8x64xf32>
    %cst_15 = arith.constant 8.99999984E-4 : f32
    %67 = vector.broadcast %cst_15 : f32 to vector<8x64xf32>
    %68 = arith.addf %66, %67 : vector<8x64xf32>
    %69 = arith.addf %62, %63 : vector<8x64xf32>
    %cst_16 = arith.constant 8.99999984E-4 : f32
    %70 = vector.broadcast %cst_16 : f32 to vector<8x64xf32>
    %71 = arith.addf %69, %70 : vector<8x64xf32>
    %72 = tpu.reciprocal %71 {approx = true} : vector<8x64xf32> -> vector<8x64xf32>
    %73 = arith.mulf %68, %72 : vector<8x64xf32>
    %74 = tpu.iota {dimensions = array<i32: 0>} : vector<8x64xi32>
    %c6_i32_17 = arith.constant 6 : i32
    %75 = vector.broadcast %c6_i32_17 : i32 to vector<8x64xi32>
    %76 = arith.cmpi slt, %74, %75 : vector<8x64xi32>
    %77 = arith.extui %76 : vector<8x64xi1> to vector<8x64xi32>
    %78 = arith.sitofp %77 : vector<8x64xi32> to vector<8x64xf32>
    %79 = arith.mulf %73, %78 : vector<8x64xf32>
    %80 = vector.shape_cast %79 : vector<8x64xf32> to vector<1x8x64xf32>
    %cst_18 = arith.constant dense<0.000000e+00> : vector<1xf32>
    %81 = vector.multi_reduction <add>, %80, %cst_18 [1, 2] : vector<1x8x64xf32> to vector<1xf32>
    %82 = vector.shape_cast %81 : vector<1xf32> to vector<1x1x1xf32>
    %83 = vector.extract %82[0, 0, 0] : f32 from vector<1x1x1xf32>
    %cst_19 = arith.constant 0.00260416674 : f32
    %84 = arith.mulf %83, %cst_19 : f32
    %85 = vector.broadcast %84 : f32 to vector<1x1xf32>
    %c0_20 = arith.constant 0 : index
    %c0_21 = arith.constant 0 : index
    %86 = vector.load %arg6[%c0_20, %c0_21] : memref<64x16xbf16, #tpu.memory_space<vmem>>, vector<64x16xbf16>
    %87 = arith.truncf %44 : vector<16x64xf32> to vector<16x64xbf16>
    %cst_22 = arith.constant dense<0.000000e+00> : vector<16x16xf32>
    %88 = tpu.matmul %87, %86, %cst_22 {dimension_numbers = #tpu.dot_dimension_numbers<[1], [0], [0], [1], [0, 0, 1, 1], [], []>} : vector<16x64xbf16>, vector<64x16xbf16>, vector<16x16xf32> -> vector<16x16xf32>
    %89 = vector.extract_strided_slice %88 {offsets = [0, 0], sizes = [8, 16], strides = [1, 1]} : vector<16x16xf32> to vector<8x16xf32>
    %90 = vector.extract_strided_slice %88 {offsets = [8, 0], sizes = [8, 16], strides = [1, 1]} : vector<16x16xf32> to vector<8x16xf32>
    %c0_23 = arith.constant 0 : index
    %c0_24 = arith.constant 0 : index
    %91 = vector.load %arg3[%c0_23, %c0_24] : memref<16x16xbf16, #tpu.memory_space<vmem>>, vector<16x16xbf16>
    %92 = arith.mulf %89, %89 : vector<8x16xf32>
    %93 = arith.mulf %90, %90 : vector<8x16xf32>
    %94 = arith.mulf %89, %90 : vector<8x16xf32>
    %95 = tpu.concatenate %88, %92, %93, %94 in 0 : vector<16x16xf32>, vector<8x16xf32>, vector<8x16xf32>, vector<8x16xf32> -> vector<40x16xf32>
    %96 = arith.truncf %95 : vector<40x16xf32> to vector<40x16xbf16>
    %cst_25 = arith.constant dense<0.000000e+00> : vector<40x16xf32>
    %97 = tpu.matmul %96, %91, %cst_25 {dimension_numbers = #tpu.dot_dimension_numbers<[1], [0], [0], [1], [0, 0, 1, 1], [], []>} : vector<40x16xbf16>, vector<16x16xbf16>, vector<40x16xf32> -> vector<40x16xf32>
    %98 = vector.extract_strided_slice %97 {offsets = [0, 0], sizes = [8, 16], strides = [1, 1]} : vector<40x16xf32> to vector<8x16xf32>
    %99 = vector.extract_strided_slice %97 {offsets = [8, 0], sizes = [8, 16], strides = [1, 1]} : vector<40x16xf32> to vector<8x16xf32>
    %100 = vector.extract_strided_slice %97 {offsets = [16, 0], sizes = [8, 16], strides = [1, 1]} : vector<40x16xf32> to vector<8x16xf32>
    %101 = vector.extract_strided_slice %97 {offsets = [24, 0], sizes = [8, 16], strides = [1, 1]} : vector<40x16xf32> to vector<8x16xf32>
    %102 = vector.extract_strided_slice %97 {offsets = [32, 0], sizes = [8, 16], strides = [1, 1]} : vector<40x16xf32> to vector<8x16xf32>
    %103 = arith.mulf %98, %98 : vector<8x16xf32>
    %104 = arith.mulf %99, %99 : vector<8x16xf32>
    %105 = arith.mulf %98, %99 : vector<8x16xf32>
    %106 = arith.subf %100, %103 : vector<8x16xf32>
    %107 = arith.subf %101, %104 : vector<8x16xf32>
    %108 = arith.subf %102, %105 : vector<8x16xf32>
    %cst_26 = arith.constant 2.000000e+00 : f32
    %109 = vector.broadcast %cst_26 : f32 to vector<8x16xf32>
    %110 = arith.mulf %109, %108 : vector<8x16xf32>
    %cst_27 = arith.constant 8.99999984E-4 : f32
    %111 = vector.broadcast %cst_27 : f32 to vector<8x16xf32>
    %112 = arith.addf %110, %111 : vector<8x16xf32>
    %113 = arith.addf %106, %107 : vector<8x16xf32>
    %cst_28 = arith.constant 8.99999984E-4 : f32
    %114 = vector.broadcast %cst_28 : f32 to vector<8x16xf32>
    %115 = arith.addf %113, %114 : vector<8x16xf32>
    %116 = tpu.reciprocal %115 {approx = true} : vector<8x16xf32> -> vector<8x16xf32>
    %117 = arith.mulf %112, %116 : vector<8x16xf32>
    %118 = tpu.iota {dimensions = array<i32: 0>} : vector<8x16xi32>
    %c6_i32_29 = arith.constant 6 : i32
    %119 = vector.broadcast %c6_i32_29 : i32 to vector<8x16xi32>
    %120 = arith.cmpi slt, %118, %119 : vector<8x16xi32>
    %121 = arith.extui %120 : vector<8x16xi1> to vector<8x16xi32>
    %122 = arith.sitofp %121 : vector<8x16xi32> to vector<8x16xf32>
    %123 = arith.mulf %117, %122 : vector<8x16xf32>
    %124 = vector.shape_cast %123 : vector<8x16xf32> to vector<1x8x16xf32>
    %cst_30 = arith.constant dense<0.000000e+00> : vector<1xf32>
    %125 = vector.multi_reduction <add>, %124, %cst_30 [1, 2] : vector<1x8x16xf32> to vector<1xf32>
    %126 = vector.shape_cast %125 : vector<1xf32> to vector<1x1x1xf32>
    %127 = vector.extract %126[0, 0, 0] : f32 from vector<1x1x1xf32>
    %cst_31 = arith.constant 0.010416667 : f32
    %128 = arith.mulf %127, %cst_31 : f32
    %129 = vector.broadcast %128 : f32 to vector<1x1xf32>
    %c0_32 = arith.constant 0 : index
    %c0_33 = arith.constant 0 : index
    %130 = vector.load %arg7[%c0_32, %c0_33] : memref<16x4xbf16, #tpu.memory_space<vmem>>, vector<16x4xbf16>
    %131 = arith.truncf %88 : vector<16x16xf32> to vector<16x16xbf16>
    %cst_34 = arith.constant dense<0.000000e+00> : vector<16x4xf32>
    %132 = tpu.matmul %131, %130, %cst_34 {dimension_numbers = #tpu.dot_dimension_numbers<[1], [0], [0], [1], [0, 0, 1, 1], [], []>} : vector<16x16xbf16>, vector<16x4xbf16>, vector<16x4xf32> -> vector<16x4xf32>
    %133 = vector.extract_strided_slice %132 {offsets = [0, 0], sizes = [8, 4], strides = [1, 1]} : vector<16x4xf32> to vector<8x4xf32>
    %134 = vector.extract_strided_slice %132 {offsets = [8, 0], sizes = [8, 4], strides = [1, 1]} : vector<16x4xf32> to vector<8x4xf32>
    %c0_35 = arith.constant 0 : index
    %c0_36 = arith.constant 0 : index
    %135 = vector.load %arg4[%c0_35, %c0_36] : memref<4x4xbf16, #tpu.memory_space<vmem>>, vector<4x4xbf16>
    %136 = arith.mulf %133, %133 : vector<8x4xf32>
    %137 = arith.mulf %134, %134 : vector<8x4xf32>
    %138 = arith.mulf %133, %134 : vector<8x4xf32>
    %139 = tpu.concatenate %132, %136, %137, %138 in 0 : vector<16x4xf32>, vector<8x4xf32>, vector<8x4xf32>, vector<8x4xf32> -> vector<40x4xf32>
    %140 = arith.truncf %139 : vector<40x4xf32> to vector<40x4xbf16>
    %cst_37 = arith.constant dense<0.000000e+00> : vector<40x4xf32>
    %141 = tpu.matmul %140, %135, %cst_37 {dimension_numbers = #tpu.dot_dimension_numbers<[1], [0], [0], [1], [0, 0, 1, 1], [], []>} : vector<40x4xbf16>, vector<4x4xbf16>, vector<40x4xf32> -> vector<40x4xf32>
    %142 = vector.extract_strided_slice %141 {offsets = [0, 0], sizes = [8, 4], strides = [1, 1]} : vector<40x4xf32> to vector<8x4xf32>
    %143 = vector.extract_strided_slice %141 {offsets = [8, 0], sizes = [8, 4], strides = [1, 1]} : vector<40x4xf32> to vector<8x4xf32>
    %144 = vector.extract_strided_slice %141 {offsets = [16, 0], sizes = [8, 4], strides = [1, 1]} : vector<40x4xf32> to vector<8x4xf32>
    %145 = vector.extract_strided_slice %141 {offsets = [24, 0], sizes = [8, 4], strides = [1, 1]} : vector<40x4xf32> to vector<8x4xf32>
    %146 = vector.extract_strided_slice %141 {offsets = [32, 0], sizes = [8, 4], strides = [1, 1]} : vector<40x4xf32> to vector<8x4xf32>
    %147 = arith.mulf %142, %142 : vector<8x4xf32>
    %148 = arith.mulf %143, %143 : vector<8x4xf32>
    %149 = arith.mulf %142, %143 : vector<8x4xf32>
    %150 = arith.subf %144, %147 : vector<8x4xf32>
    %151 = arith.subf %145, %148 : vector<8x4xf32>
    %152 = arith.subf %146, %149 : vector<8x4xf32>
    %cst_38 = arith.constant 2.000000e+00 : f32
    %153 = vector.broadcast %cst_38 : f32 to vector<8x4xf32>
    %154 = arith.mulf %153, %152 : vector<8x4xf32>
    %cst_39 = arith.constant 8.99999984E-4 : f32
    %155 = vector.broadcast %cst_39 : f32 to vector<8x4xf32>
    %156 = arith.addf %154, %155 : vector<8x4xf32>
    %157 = arith.addf %150, %151 : vector<8x4xf32>
    %cst_40 = arith.constant 8.99999984E-4 : f32
    %158 = vector.broadcast %cst_40 : f32 to vector<8x4xf32>
    %159 = arith.addf %157, %158 : vector<8x4xf32>
    %160 = tpu.reciprocal %159 {approx = true} : vector<8x4xf32> -> vector<8x4xf32>
    %161 = arith.mulf %156, %160 : vector<8x4xf32>
    %162 = tpu.iota {dimensions = array<i32: 0>} : vector<8x4xi32>
    %c6_i32_41 = arith.constant 6 : i32
    %163 = vector.broadcast %c6_i32_41 : i32 to vector<8x4xi32>
    %164 = arith.cmpi slt, %162, %163 : vector<8x4xi32>
    %165 = arith.extui %164 : vector<8x4xi1> to vector<8x4xi32>
    %166 = arith.sitofp %165 : vector<8x4xi32> to vector<8x4xf32>
    %167 = arith.mulf %161, %166 : vector<8x4xf32>
    %168 = vector.shape_cast %167 : vector<8x4xf32> to vector<1x8x4xf32>
    %cst_42 = arith.constant dense<0.000000e+00> : vector<1xf32>
    %169 = vector.multi_reduction <add>, %168, %cst_42 [1, 2] : vector<1x8x4xf32> to vector<1xf32>
    %170 = vector.shape_cast %169 : vector<1xf32> to vector<1x1x1xf32>
    %171 = vector.extract %170[0, 0, 0] : f32 from vector<1x1x1xf32>
    %cst_43 = arith.constant 0.0416666679 : f32
    %172 = arith.mulf %171, %cst_43 : f32
    %173 = vector.broadcast %172 : f32 to vector<1x1xf32>
    %cst_44 = arith.constant dense<0.000000e+00> : vector<16xf32>
    %174 = vector.multi_reduction <add>, %132, %cst_44 [1] : vector<16x4xf32> to vector<16xf32>
    %175 = vector.shape_cast %174 : vector<16xf32> to vector<16x1xf32>
    %cst_45 = arith.constant 2.500000e-01 : f32
    %176 = vector.broadcast %cst_45 : f32 to vector<16x1xf32>
    %177 = arith.mulf %176, %175 : vector<16x1xf32>
    %178 = vector.extract_strided_slice %177 {offsets = [0, 0], sizes = [8, 1], strides = [1, 1]} : vector<16x1xf32> to vector<8x1xf32>
    %179 = vector.extract_strided_slice %177 {offsets = [8, 0], sizes = [8, 1], strides = [1, 1]} : vector<16x1xf32> to vector<8x1xf32>
    %cst_46 = arith.constant 2.68308054E-6 : f32
    %180 = vector.broadcast %cst_46 : f32 to vector<8x1xf32>
    %181 = arith.mulf %178, %180 : vector<8x1xf32>
    %cst_47 = arith.constant 2.68308054E-6 : f32
    %182 = vector.broadcast %cst_47 : f32 to vector<8x1xf32>
    %183 = arith.mulf %179, %182 : vector<8x1xf32>
    %184 = arith.mulf %178, %178 : vector<8x1xf32>
    %cst_48 = arith.constant 2.68308054E-6 : f32
    %185 = vector.broadcast %cst_48 : f32 to vector<8x1xf32>
    %186 = arith.mulf %184, %185 : vector<8x1xf32>
    %187 = arith.mulf %179, %179 : vector<8x1xf32>
    %cst_49 = arith.constant 2.68308054E-6 : f32
    %188 = vector.broadcast %cst_49 : f32 to vector<8x1xf32>
    %189 = arith.mulf %187, %188 : vector<8x1xf32>
    %190 = arith.mulf %178, %179 : vector<8x1xf32>
    %cst_50 = arith.constant 2.68308054E-6 : f32
    %191 = vector.broadcast %cst_50 : f32 to vector<8x1xf32>
    %192 = arith.mulf %190, %191 : vector<8x1xf32>
    %193 = arith.mulf %181, %181 : vector<8x1xf32>
    %194 = arith.mulf %183, %183 : vector<8x1xf32>
    %195 = arith.mulf %181, %183 : vector<8x1xf32>
    %196 = arith.subf %186, %193 : vector<8x1xf32>
    %197 = arith.subf %189, %194 : vector<8x1xf32>
    %198 = arith.subf %192, %195 : vector<8x1xf32>
    %cst_51 = arith.constant 2.000000e+00 : f32
    %199 = vector.broadcast %cst_51 : f32 to vector<8x1xf32>
    %200 = arith.mulf %199, %198 : vector<8x1xf32>
    %cst_52 = arith.constant 8.99999984E-4 : f32
    %201 = vector.broadcast %cst_52 : f32 to vector<8x1xf32>
    %202 = arith.addf %200, %201 : vector<8x1xf32>
    %203 = arith.addf %196, %197 : vector<8x1xf32>
    %cst_53 = arith.constant 8.99999984E-4 : f32
    %204 = vector.broadcast %cst_53 : f32 to vector<8x1xf32>
    %205 = arith.addf %203, %204 : vector<8x1xf32>
    %206 = tpu.reciprocal %205 {approx = true} : vector<8x1xf32> -> vector<8x1xf32>
    %207 = arith.mulf %202, %206 : vector<8x1xf32>
    %cst_54 = arith.constant 2.000000e+00 : f32
    %208 = vector.broadcast %cst_54 : f32 to vector<8x1xf32>
    %209 = arith.mulf %208, %195 : vector<8x1xf32>
    %cst_55 = arith.constant 9.99999974E-5 : f32
    %210 = vector.broadcast %cst_55 : f32 to vector<8x1xf32>
    %211 = arith.addf %209, %210 : vector<8x1xf32>
    %212 = arith.addf %193, %194 : vector<8x1xf32>
    %cst_56 = arith.constant 9.99999974E-5 : f32
    %213 = vector.broadcast %cst_56 : f32 to vector<8x1xf32>
    %214 = arith.addf %212, %213 : vector<8x1xf32>
    %215 = tpu.reciprocal %214 {approx = true} : vector<8x1xf32> -> vector<8x1xf32>
    %216 = arith.mulf %211, %215 : vector<8x1xf32>
    %217 = arith.mulf %216, %207 : vector<8x1xf32>
    %218 = tpu.iota {dimensions = array<i32: 0>} : vector<8x1xi32>
    %c6_i32_57 = arith.constant 6 : i32
    %219 = vector.broadcast %c6_i32_57 : i32 to vector<8x1xi32>
    %220 = arith.cmpi slt, %218, %219 : vector<8x1xi32>
    %221 = arith.extui %220 : vector<8x1xi1> to vector<8x1xi32>
    %222 = arith.sitofp %221 : vector<8x1xi32> to vector<8x1xf32>
    %223 = arith.mulf %217, %222 : vector<8x1xf32>
    %224 = vector.shape_cast %223 : vector<8x1xf32> to vector<1x8x1xf32>
    %cst_58 = arith.constant dense<0.000000e+00> : vector<1xf32>
    %225 = vector.multi_reduction <add>, %224, %cst_58 [1, 2] : vector<1x8x1xf32> to vector<1xf32>
    %226 = vector.shape_cast %225 : vector<1xf32> to vector<1x1x1xf32>
    %227 = vector.extract %226[0, 0, 0] : f32 from vector<1x1x1xf32>
    %cst_59 = arith.constant 0.166666672 : f32
    %228 = arith.mulf %227, %cst_59 : f32
    %229 = vector.broadcast %228 : f32 to vector<1x1xf32>
    %230 = math.log %41 : vector<1x1xf32>
    %cst_60 = arith.constant 4.480000e-02 : f32
    %231 = vector.broadcast %cst_60 : f32 to vector<1x1xf32>
    %232 = arith.mulf %231, %230 : vector<1x1xf32>
    %233 = math.exp %232 : vector<1x1xf32>
    %234 = math.log %85 : vector<1x1xf32>
    %cst_61 = arith.constant 2.856000e-01 : f32
    %235 = vector.broadcast %cst_61 : f32 to vector<1x1xf32>
    %236 = arith.mulf %235, %234 : vector<1x1xf32>
    %237 = math.exp %236 : vector<1x1xf32>
    %238 = arith.mulf %233, %237 : vector<1x1xf32>
    %239 = math.log %129 : vector<1x1xf32>
    %cst_62 = arith.constant 3.001000e-01 : f32
    %240 = vector.broadcast %cst_62 : f32 to vector<1x1xf32>
    %241 = arith.mulf %240, %239 : vector<1x1xf32>
    %242 = math.exp %241 : vector<1x1xf32>
    %243 = arith.mulf %238, %242 : vector<1x1xf32>
    %244 = math.log %173 : vector<1x1xf32>
    %cst_63 = arith.constant 2.363000e-01 : f32
    %245 = vector.broadcast %cst_63 : f32 to vector<1x1xf32>
    %246 = arith.mulf %245, %244 : vector<1x1xf32>
    %247 = math.exp %246 : vector<1x1xf32>
    %248 = arith.mulf %243, %247 : vector<1x1xf32>
    %249 = math.log %229 : vector<1x1xf32>
    %cst_64 = arith.constant 5.332000e-01 : f32
    %250 = vector.broadcast %cst_64 : f32 to vector<1x1xf32>
    %251 = arith.mulf %250, %249 : vector<1x1xf32>
    %252 = math.exp %251 : vector<1x1xf32>
    %253 = arith.mulf %248, %252 : vector<1x1xf32>
    %cst_65 = arith.constant 1.000000e+00 : f32
    %254 = vector.broadcast %cst_65 : f32 to vector<1x1xf32>
    %255 = arith.subf %254, %253 : vector<1x1xf32>
    %c0_66 = arith.constant 0 : index
    %c0_67 = arith.constant 0 : index
    %256 = vector.load %arg8[%c0_66, %c0_67] : memref<1x1xf32, #tpu.memory_space<vmem>>, vector<1x1xf32>
    tpu.vector_store %arg8[%c0_66, %c0_67], %255 {strides = array<i32>} : memref<1x1xf32, #tpu.memory_space<vmem>>, vector<1x1xf32>,
    return
  }
}

</mosaic_0001>

<llo_original>
// kernel: forward.1
$region0: #{forward.1}
  #allocation0 [shape = 'u32[]', space=smem, size = 0x4, offset = 0x4, fixed_abs, tag = 'smem constant byte address 0x4 - core index']
  #allocation1 [shape = 'u32[144,128]{1,0:T(1,128)}', space=vmem, size = 0x12000, scoped, tag = 'internal scratch']
  %s0 = inlined_call_operand.vmem [shape: f32[16,256], index: 0, kind: input, shape index: {}]
  %s1 = inlined_call_operand.vmem [shape: bf16[256,256], index: 1, kind: input, shape index: {}]
  %s2 = inlined_call_operand.vmem [shape: bf16[64,64], index: 2, kind: input, shape index: {}]
  %s3 = inlined_call_operand.vmem [shape: bf16[16,16], index: 3, kind: input, shape index: {}]
  %s4 = inlined_call_operand.vmem [shape: bf16[4,4], index: 4, kind: input, shape index: {}]
  %s5 = inlined_call_operand.vmem [shape: bf16[256,64], index: 5, kind: input, shape index: {}]
  %s6 = inlined_call_operand.vmem [shape: bf16[64,16], index: 6, kind: input, shape index: {}]
  %s7 = inlined_call_operand.vmem [shape: bf16[16,4], index: 7, kind: input, shape index: {}]
  %s8 = inlined_call_operand.hbm [shape: f32[1,1], index: 8, kind: output, shape index: {}]
  %s9 = sld [smem:[#allocation0]]
  $region42: #{forward.1} parent=0
    _
  %s11 = ssub.s32 1, %s9
  %s12 = scalar_select 0, %s11, %s9
  $region1: #{forward.1} parent=0
    #allocation2 [shape = 'u8[512]{0}', space=vmem, size = 0x400, scoped, tag = 'output window, operand 0, single buffered']
    #allocation3 [shape = 's32[1]{0}', space=sflag, size = 0x4, scoped, tag = 'scoped memory for forward.1']
    %13 = vsyncpa [#allocation3], 0
    // Predicated region
    $region2: #{forward.1} parent=1 // pred_check
      _
    $region3: #{forward.1} parent=1 // pred_check_branch
      %15 = sbr.rel (0) target = $region5
    $region4: #{forward.1} parent=1 // pred_region
      _
    $region5: #{forward.1} parent=1 // pred_fallthru
      _
    // Predicated region
    $region6: #{forward.1} parent=1 // pred_check
      _
    $region7: #{forward.1} parent=1 // pred_check_branch
      %17 = sbr.rel (0) target = $region9
    $region8: #{forward.1} parent=1 // pred_region
      _
    $region9: #{forward.1} parent=1 // pred_fallthru
      _
    // Predicated region
    $region10: #{forward.1} parent=1 // pred_check
      _
    $region11: #{forward.1} parent=1 // pred_check_branch
      %19 = sbr.rel (0) target = $region13
    $region12: #{forward.1} parent=1 // pred_region
      _
    $region13: #{forward.1} parent=1 // pred_fallthru
      _
    // Predicated region
    $region14: #{forward.1} parent=1 // pred_check
      _
    $region15: #{forward.1} parent=1 // pred_check_branch
      %21 = sbr.rel (0) target = $region17
    $region16: #{forward.1} parent=1 // pred_region
      _
    $region17: #{forward.1} parent=1 // pred_fallthru
      _
    // Predicated region
    $region18: #{forward.1} parent=1 // pred_check
      _
    $region19: #{forward.1} parent=1 // pred_check_branch
      %23 = sbr.rel (0) target = $region21
    $region20: #{forward.1} parent=1 // pred_region
      _
    $region21: #{forward.1} parent=1 // pred_fallthru
      _
    // Predicated region
    $region22: #{forward.1} parent=1 // pred_check
      _
    $region23: #{forward.1} parent=1 // pred_check_branch
      %25 = sbr.rel (0) target = $region25
    $region24: #{forward.1} parent=1 // pred_region
      _
    $region25: #{forward.1} parent=1 // pred_fallthru
      _
    // Predicated region
    $region26: #{forward.1} parent=1 // pred_check
      _
    $region27: #{forward.1} parent=1 // pred_check_branch
      %27 = sbr.rel (0) target = $region29
    $region28: #{forward.1} parent=1 // pred_region
      _
    $region29: #{forward.1} parent=1 // pred_fallthru
      _
    // Predicated region
    $region30: #{forward.1} parent=1 // pred_check
      _
    $region31: #{forward.1} parent=1 // pred_check_branch
      %29 = sbr.rel (0) target = $region33
    $region32: #{forward.1} parent=1 // pred_region
      _
    $region33: #{forward.1} parent=1 // pred_fallthru
      _
    %v31 = vld [vmem:[%s0] sm:$0xff]
    %v32 = vld [vmem:[%s0 + $0x8] sm:$0xff]
    %v33 = vld [vmem:[%s0 + $0x10] sm:$0xff]
    %v34 = vld [vmem:[%s0 + $0x18] sm:$0xff]
    %v35 = vld [vmem:[%s1] sm:$0xff]
    %v36 = vld [vmem:[%s1 + $0x8] sm:$0xff]
    %v37 = vld [vmem:[%s1 + $0x10] sm:$0xff]
    %v38 = vld [vmem:[%s1 + $0x18] sm:$0xff]
    %v39 = vld [vmem:[%s1 + $0x20] sm:$0xff]
    %v40 = vld [vmem:[%s1 + $0x28] sm:$0xff]
    %v41 = vld [vmem:[%s1 + $0x30] sm:$0xff]
    %v42 = vld [vmem:[%s1 + $0x38] sm:$0xff]
    %v43 = vld [vmem:[%s1 + $0x40] sm:$0xff]
    %v44 = vld [vmem:[%s1 + $0x48] sm:$0xff]
    %v45 = vld [vmem:[%s1 + $0x50] sm:$0xff]
    %v46 = vld [vmem:[%s1 + $0x58] sm:$0xff]
    %v47 = vld [vmem:[%s1 + $0x60] sm:$0xff]
    %v48 = vld [vmem:[%s1 + $0x68] sm:$0xff]
    %v49 = vld [vmem:[%s1 + $0x70] sm:$0xff]
    %v50 = vld [vmem:[%s1 + $0x78] sm:$0xff]
    %v51 = vld [vmem:[%s1 + $0x80] sm:$0xff]
    %v52 = vld [vmem:[%s1 + $0x88] sm:$0xff]
    %v53 = vld [vmem:[%s1 + $0x90] sm:$0xff]
    %v54 = vld [vmem:[%s1 + $0x98] sm:$0xff]
    %v55 = vld [vmem:[%s1 + $0xa0] sm:$0xff]
    %v56 = vld [vmem:[%s1 + $0xa8] sm:$0xff]
    %v57 = vld [vmem:[%s1 + $0xb0] sm:$0xff]
    %v58 = vld [vmem:[%s1 + $0xb8] sm:$0xff]
    %v59 = vld [vmem:[%s1 + $0xc0] sm:$0xff]
    %v60 = vld [vmem:[%s1 + $0xc8] sm:$0xff]
    %v61 = vld [vmem:[%s1 + $0xd0] sm:$0xff]
    %v62 = vld [vmem:[%s1 + $0xd8] sm:$0xff]
    %v63 = vld [vmem:[%s1 + $0xe0] sm:$0xff]
    %v64 = vld [vmem:[%s1 + $0xe8] sm:$0xff]
    %v65 = vld [vmem:[%s1 + $0xf0] sm:$0xff]
    %v66 = vld [vmem:[%s1 + $0xf8] sm:$0xff]
    %v67 = vmul.f32 %v31, %v31
    %v68 = vmul.f32 %v32, %v32
    %v69 = vmul.f32 %v33, %v33
    %v70 = vmul.f32 %v34, %v34
    %v71 = vmul.f32 %v31, %v33
    %v72 = vmul.f32 %v32, %v34
    %v73 = vpack.c.bf16 %v33, %v31
    %v74 = vpack.c.bf16 %v34, %v32
    %v75 = vpack.c.bf16 %v69, %v67
    %v76 = vpack.c.bf16 %v70, %v68
    %v77 = vpack.c.bf16 %v71, %v71
    %v78 = vpack.c.bf16 %v72, %v72
    %v111 = vunpack.c.l.b16 %v35
    %v112 = vunpack.c.h.b16 %v35
    %v113 = vunpack.c.l.b16 %v36
    %v114 = vunpack.c.h.b16 %v36
    %v115 = vunpack.c.l.b16 %v37
    %v116 = vunpack.c.h.b16 %v37
    %v117 = vunpack.c.l.b16 %v38
    %v118 = vunpack.c.h.b16 %v38
    %v119 = vunpack.c.l.b16 %v39
    %v120 = vunpack.c.h.b16 %v39
    %v121 = vunpack.c.l.b16 %v40
    %v122 = vunpack.c.h.b16 %v40
    %v123 = vunpack.c.l.b16 %v41
    %v124 = vunpack.c.h.b16 %v41
    %v125 = vunpack.c.l.b16 %v42
    %v126 = vunpack.c.h.b16 %v42
    %v127 = vunpack.c.l.b16 %v43
    %v128 = vunpack.c.h.b16 %v43
    %v129 = vunpack.c.l.b16 %v44
    %v130 = vunpack.c.h.b16 %v44
    %v131 = vunpack.c.l.b16 %v45
    %v132 = vunpack.c.h.b16 %v45
    %v133 = vunpack.c.l.b16 %v46
    %v134 = vunpack.c.h.b16 %v46
    %v135 = vunpack.c.l.b16 %v47
    %v136 = vunpack.c.h.b16 %v47
    %v137 = vunpack.c.l.b16 %v48
    %v138 = vunpack.c.h.b16 %v48
    %v139 = vunpack.c.l.b16 %v49
    %v140 = vunpack.c.h.b16 %v49
    %v141 = vunpack.c.l.b16 %v50
    %v142 = vunpack.c.h.b16 %v50
    %v143 = vunpack.c.l.b16 %v51
    %v144 = vunpack.c.h.b16 %v51
    %v145 = vunpack.c.l.b16 %v52
    %v146 = vunpack.c.h.b16 %v52
    %v147 = vunpack.c.l.b16 %v53
    %v148 = vunpack.c.h.b16 %v53
    %v149 = vunpack.c.l.b16 %v54
    %v150 = vunpack.c.h.b16 %v54
    %v151 = vunpack.c.l.b16 %v55
    %v152 = vunpack.c.h.b16 %v55
    %v153 = vunpack.c.l.b16 %v56
    %v154 = vunpack.c.h.b16 %v56
    %v155 = vunpack.c.l.b16 %v57
    %v156 = vunpack.c.h.b16 %v57
    %v157 = vunpack.c.l.b16 %v58
    %v158 = vunpack.c.h.b16 %v58
    %v159 = vunpack.c.l.b16 %v59
    %v160 = vunpack.c.h.b16 %v59
    %v161 = vunpack.c.l.b16 %v60
    %v162 = vunpack.c.h.b16 %v60
    %v163 = vunpack.c.l.b16 %v61
    %v164 = vunpack.c.h.b16 %v61
    %v165 = vunpack.c.l.b16 %v62
    %v166 = vunpack.c.h.b16 %v62
    %v167 = vunpack.c.l.b16 %v63
    %v168 = vunpack.c.h.b16 %v63
    %v169 = vunpack.c.l.b16 %v64
    %v170 = vunpack.c.h.b16 %v64
    %v171 = vunpack.c.l.b16 %v65
    %v172 = vunpack.c.h.b16 %v65
    %v173 = vunpack.c.l.b16 %v66
    %v174 = vunpack.c.h.b16 %v66
    %v175 = vpack.c.b16 %v113, %v111
    %v176 = vpack.c.b16 %v114, %v112
    %v177 = vpack.c.b16 %v117, %v115
    %v178 = vpack.c.b16 %v118, %v116
    %v179 = vpack.c.b16 %v121, %v119
    %v180 = vpack.c.b16 %v122, %v120
    %v181 = vpack.c.b16 %v125, %v123
    %v182 = vpack.c.b16 %v126, %v124
    %v183 = vpack.c.b16 %v129, %v127
    %v184 = vpack.c.b16 %v130, %v128
    %v185 = vpack.c.b16 %v133, %v131
    %v186 = vpack.c.b16 %v134, %v132
    %v187 = vpack.c.b16 %v137, %v135
    %v188 = vpack.c.b16 %v138, %v136
    %v189 = vpack.c.b16 %v141, %v139
    %v190 = vpack.c.b16 %v142, %v140
    %v191 = vpack.c.b16 %v145, %v143
    %v192 = vpack.c.b16 %v146, %v144
    %v193 = vpack.c.b16 %v149, %v147
    %v194 = vpack.c.b16 %v150, %v148
    %v195 = vpack.c.b16 %v153, %v151
    %v196 = vpack.c.b16 %v154, %v152
    %v197 = vpack.c.b16 %v157, %v155
    %v198 = vpack.c.b16 %v158, %v156
    %v199 = vpack.c.b16 %v161, %v159
    %v200 = vpack.c.b16 %v162, %v160
    %v201 = vpack.c.b16 %v165, %v163
    %v202 = vpack.c.b16 %v166, %v164
    %v203 = vpack.c.b16 %v169, %v167
    %v204 = vpack.c.b16 %v170, %v168
    %v205 = vpack.c.b16 %v173, %v171
    %v206 = vpack.c.b16 %v174, %v172
    %239 = vmatprep.subr.bf16.mxu0 %v176
    %240 = vmatpush1.bf16.msra.mxu0 %v175
    %241 = vmatprep.subr.bf16.mxu0 %v178
    %242 = vmatpush1.bf16.msra.mxu0 %v177
    %243 = vmatprep.subr.bf16.mxu0 %v180
    %244 = vmatpush1.bf16.msra.mxu0 %v179
    %245 = vmatprep.subr.bf16.mxu0 %v182
    %246 = vmatpush1.bf16.msra.mxu0 %v181
    %247 = vmatprep.subr.bf16.mxu0 %v184
    %248 = vmatpush1.bf16.msra.mxu0 %v183
    %249 = vmatprep.subr.bf16.mxu0 %v186
    %250 = vmatpush1.bf16.msra.mxu0 %v185
    %251 = vmatprep.subr.bf16.mxu0 %v188
    %252 = vmatpush1.bf16.msra.mxu0 %v187
    %253 = vmatprep.subr.bf16.mxu0 %v190
    %254 = vmatpush1.bf16.msra.mxu0 %v189
    %255 = vmatprep.subr.bf16.mxu0 %v192
    %256 = vmatpush1.bf16.msra.mxu0 %v191
    %257 = vmatprep.subr.bf16.mxu0 %v194
    %258 = vmatpush1.bf16.msra.mxu0 %v193
    %259 = vmatprep.subr.bf16.mxu0 %v196
    %260 = vmatpush1.bf16.msra.mxu0 %v195
    %261 = vmatprep.subr.bf16.mxu0 %v198
    %262 = vmatpush1.bf16.msra.mxu0 %v197
    %263 = vmatprep.subr.bf16.mxu0 %v200
    %264 = vmatpush1.bf16.msra.mxu0 %v199
    %265 = vmatprep.subr.bf16.mxu0 %v202
    %266 = vmatpush1.bf16.msra.mxu0 %v201
    %267 = vmatprep.subr.bf16.mxu0 %v204
    %268 = vmatpush1.bf16.msra.mxu0 %v203
    %269 = vmatprep.subr.bf16.mxu0 %v206
    %270 = vmatpush1.bf16.msra.mxu0 %v205
    %271 = vmatprep.mubr.bf16.mxu0 %v74
    %272 = vmatmul.mubr.bf16.gmra.mrb[0].mxu0 %v73
    %v273 = vpop.f32.mrb[0].mxu0
    %v274 = vadd.f32 0.0, %v273
    %v275 = vpop.f32.mrb[0].mxu0
    %v276 = vadd.f32 0.0, %v275
    %v277 = vpop.f32.mrb[0].mxu0
    %v278 = vadd.f32 0.0, %v277
    %v279 = vpop.f32.mrb[0].mxu0
    %v280 = vadd.f32 0.0, %v279
    %281 = vmatprep.mubr.bf16.mxu0 %v76
    %282 = vmatmul.mubr.bf16.gmra.mrb[0].mxu0 %v75
    %v283 = vpop.f32.mrb[0].mxu0
    %v284 = vadd.f32 0.0, %v283
    %v285 = vpop.f32.mrb[0].mxu0
    %v286 = vadd.f32 0.0, %v285
    %v287 = vpop.f32.mrb[0].mxu0
    %v288 = vadd.f32 0.0, %v287
    %v289 = vpop.f32.mrb[0].mxu0
    %v290 = vadd.f32 0.0, %v289
    %291 = vmatprep.mubr.bf16.mxu0 %v78
    %292 = vmatmul.mubr.bf16.gmra.mrb[0].mxu0 %v77
    %v293 = vpop.f32.mrb[0].mxu0
    %v294 = vadd.f32 0.0, %v293
    %v295 = vpop.f32.mrb[0].mxu0
    %v296 = vadd.f32 0.0, %v295
    %v297 = vpop.f32.mrb[0].mxu0
    %v298 = vpop.f32.mrb[0].mxu0
    %299 = vdwg.mxu0
    %v300 = vmul.f32 %v274, %v274
    %v301 = vmul.f32 %v276, %v276
    %v302 = vmul.f32 %v278, %v278
    %v303 = vmul.f32 %v280, %v280
    %v304 = vmul.f32 %v274, %v278
    %v305 = vmul.f32 %v276, %v280
    %v306 = vsub.f32 %v284, %v300
    %v307 = vsub.f32 %v286, %v301
    %v308 = vsub.f32 %v288, %v302
    %v309 = vsub.f32 %v290, %v303
    %v310 = vsub.f32 %v294, %v304
    %v311 = vsub.f32 %v296, %v305
    %v312 = vmul.f32 %v310, 2.0
    %v313 = vmul.f32 %v311, 2.0
    %v314 = vadd.f32 %v312, 0.0009
    %v315 = vadd.f32 %v313, 0.0009
    %v316 = vadd.f32 %v306, %v308
    %v317 = vadd.f32 %v307, %v309
    %v318 = vadd.f32 %v316, 0.0009
    %v319 = vadd.f32 %v317, 0.0009
    %v320 = vrcp.pop %v318
    %v321 = vrcp.pop %v319
    %v322 = vmul.f32 %v314, %v320
    %v323 = vmul.f32 %v315, %v321
    %v324 = vlaneseq
    %v325 = vshrl.u32 %v324, 7
    %vm326 = vcmp.lt.s32.totalorder %v325, 6
    %v327 = vsel %vm326, 1, 0
    %v328 = vcvt.s32.f32 %v327
    %v329 = vmul.f32 %v322, %v328
    %v330 = vmul.f32 %v323, %v328
    %v331 = vadd.f32 %v329, %v330
    %332 = vadd.xlane.f32.xlu0 %v331
    %v333 = vpop.xlane.xlu0 %332
    %v334 = vrot.slane %v333, 4
    %v335 = vadd.f32 %v333, %v334
    %v336 = vrot.slane %v335, 2
    %v337 = vadd.f32 %v335, %v336
    %v338 = vrot.slane %v337, 1
    %v339 = vadd.f32 %v337, %v338
    %s340 = vtos %v339
    %s341 = smul.f32 %s340, 0.0006510417
    %v342 = vstv %s341
    %v343 = vld [vmem:[%s5] sm:$0xf]
    %v344 = vld [vmem:[%s5 + $0x4] sm:$0xf]
    %v345 = vld [vmem:[%s5 + $0x8] sm:$0xf]
    %v346 = vld [vmem:[%s5 + $0xc] sm:$0xf]
    %v347 = vld [vmem:[%s5 + $0x10] sm:$0xf]
    %v348 = vld [vmem:[%s5 + $0x14] sm:$0xf]
    %v349 = vld [vmem:[%s5 + $0x18] sm:$0xf]
    %v350 = vld [vmem:[%s5 + $0x1c] sm:$0xf]
    %v351 = vld [vmem:[%s5 + $0x20] sm:$0xf]
    %v352 = vld [vmem:[%s5 + $0x24] sm:$0xf]
    %v353 = vld [vmem:[%s5 + $0x28] sm:$0xf]
    %v354 = vld [vmem:[%s5 + $0x2c] sm:$0xf]
    %v355 = vld [vmem:[%s5 + $0x30] sm:$0xf]
    %v356 = vld [vmem:[%s5 + $0x34] sm:$0xf]
    %v357 = vld [vmem:[%s5 + $0x38] sm:$0xf]
    %v358 = vld [vmem:[%s5 + $0x3c] sm:$0xf]
    %v359 = vld [vmem:[%s5 + $0x40] sm:$0xf]
    %v360 = vld [vmem:[%s5 + $0x44] sm:$0xf]
    %v361 = vld [vmem:[%s5 + $0x48] sm:$0xf]
    %v362 = vld [vmem:[%s5 + $0x4c] sm:$0xf]
    %v363 = vld [vmem:[%s5 + $0x50] sm:$0xf]
    %v364 = vld [vmem:[%s5 + $0x54] sm:$0xf]
    %v365 = vld [vmem:[%s5 + $0x58] sm:$0xf]
    %v366 = vld [vmem:[%s5 + $0x5c] sm:$0xf]
    %v367 = vld [vmem:[%s5 + $0x60] sm:$0xf]
    %v368 = vld [vmem:[%s5 + $0x64] sm:$0xf]
    %v369 = vld [vmem:[%s5 + $0x68] sm:$0xf]
    %v370 = vld [vmem:[%s5 + $0x6c] sm:$0xf]
    %v371 = vld [vmem:[%s5 + $0x70] sm:$0xf]
    %v372 = vld [vmem:[%s5 + $0x74] sm:$0xf]
    %v373 = vld [vmem:[%s5 + $0x78] sm:$0xf]
    %v374 = vld [vmem:[%s5 + $0x7c] sm:$0xf]
    %v407 = vunpack.c.l.b16 %v343
    %v408 = vunpack.c.l.b16 %v344
    %v409 = vunpack.c.l.b16 %v345
    %v410 = vunpack.c.l.b16 %v346
    %v411 = vunpack.c.l.b16 %v347
    %v412 = vunpack.c.l.b16 %v348
    %v413 = vunpack.c.l.b16 %v349
    %v414 = vunpack.c.l.b16 %v350
    %v415 = vunpack.c.l.b16 %v351
    %v416 = vunpack.c.l.b16 %v352
    %v417 = vunpack.c.l.b16 %v353
    %v418 = vunpack.c.l.b16 %v354
    %v419 = vunpack.c.l.b16 %v355
    %v420 = vunpack.c.l.b16 %v356
    %v421 = vunpack.c.l.b16 %v357
    %v422 = vunpack.c.l.b16 %v358
    %v423 = vunpack.c.l.b16 %v359
    %v424 = vunpack.c.l.b16 %v360
    %v425 = vunpack.c.l.b16 %v361
    %v426 = vunpack.c.l.b16 %v362
    %v427 = vunpack.c.l.b16 %v363
    %v428 = vunpack.c.l.b16 %v364
    %v429 = vunpack.c.l.b16 %v365
    %v430 = vunpack.c.l.b16 %v366
    %v431 = vunpack.c.l.b16 %v367
    %v432 = vunpack.c.l.b16 %v368
    %v433 = vunpack.c.l.b16 %v369
    %v434 = vunpack.c.l.b16 %v370
    %v435 = vunpack.c.l.b16 %v371
    %v436 = vunpack.c.l.b16 %v372
    %v437 = vunpack.c.l.b16 %v373
    %v438 = vunpack.c.l.b16 %v374
    %v439 = vpack.c.b16 %v408, %v407
    %v440 = vpack.c.b16 %v410, %v409
    %v441 = vpack.c.b16 %v412, %v411
    %v442 = vpack.c.b16 %v414, %v413
    %v443 = vpack.c.b16 %v416, %v415
    %v444 = vpack.c.b16 %v418, %v417
    %v445 = vpack.c.b16 %v420, %v419
    %v446 = vpack.c.b16 %v422, %v421
    %v447 = vpack.c.b16 %v424, %v423
    %v448 = vpack.c.b16 %v426, %v425
    %v449 = vpack.c.b16 %v428, %v427
    %v450 = vpack.c.b16 %v430, %v429
    %v451 = vpack.c.b16 %v432, %v431
    %v452 = vpack.c.b16 %v434, %v433
    %v453 = vpack.c.b16 %v436, %v435
    %v454 = vpack.c.b16 %v438, %v437
    %471 = vmatprep.subr.bf16.mxu0 0
    %472 = vmatpush1.bf16.msra.mxu0 %v439
    %473 = vmatprep.subr.bf16.mxu0 0
    %474 = vmatpush1.bf16.msra.mxu0 %v440
    %475 = vmatprep.subr.bf16.mxu0 0
    %476 = vmatpush1.bf16.msra.mxu0 %v441
    %477 = vmatprep.subr.bf16.mxu0 0
    %478 = vmatpush1.bf16.msra.mxu0 %v442
    %479 = vmatprep.subr.bf16.mxu0 0
    %480 = vmatpush1.bf16.msra.mxu0 %v443
    %481 = vmatprep.subr.bf16.mxu0 0
    %482 = vmatpush1.bf16.msra.mxu0 %v444
    %483 = vmatprep.subr.bf16.mxu0 0
    %484 = vmatpush1.bf16.msra.mxu0 %v445
    %485 = vmatprep.subr.bf16.mxu0 0
    %486 = vmatpush1.bf16.msra.mxu0 %v446
    %487 = vmatprep.subr.bf16.mxu0 0
    %488 = vmatpush1.bf16.msra.mxu0 %v447
    %489 = vmatprep.subr.bf16.mxu0 0
    %490 = vmatpush1.bf16.msra.mxu0 %v448
    %491 = vmatprep.subr.bf16.mxu0 0
    %492 = vmatpush1.bf16.msra.mxu0 %v449
    %493 = vmatprep.subr.bf16.mxu0 0
    %494 = vmatpush1.bf16.msra.mxu0 %v450
    %495 = vmatprep.subr.bf16.mxu0 0
    %496 = vmatpush1.bf16.msra.mxu0 %v451
    %497 = vmatprep.subr.bf16.mxu0 0
    %498 = vmatpush1.bf16.msra.mxu0 %v452
    %499 = vmatprep.subr.bf16.mxu0 0
    %500 = vmatpush1.bf16.msra.mxu0 %v453
    %501 = vmatprep.subr.bf16.mxu0 0
    %502 = vmatpush1.bf16.msra.mxu0 %v454
    %503 = vmatprep.mubr.bf16.mxu0 %v74
    %504 = vmatmul.mubr.bf16.gmra.mrb[0].mxu0 %v73
    %v505 = vpop.f32.mrb[0].mxu0
    %v506 = vadd.f32 0.0, %v505
    %v507 = vpop.f32.mrb[0].mxu0
    %v508 = vpop.f32.mrb[0].mxu0
    %v509 = vadd.f32 0.0, %v508
    %v510 = vpop.f32.mrb[0].mxu0
    %511 = vdwg.mxu0
    %v512 = vld [vmem:[%s2] sm:$0xf]
    %v513 = vld [vmem:[%s2 + $0x4] sm:$0xf]
    %v514 = vld [vmem:[%s2 + $0x8] sm:$0xf]
    %v515 = vld [vmem:[%s2 + $0xc] sm:$0xf]
    %v516 = vld [vmem:[%s2 + $0x10] sm:$0xf]
    %v517 = vld [vmem:[%s2 + $0x14] sm:$0xf]
    %v518 = vld [vmem:[%s2 + $0x18] sm:$0xf]
    %v519 = vld [vmem:[%s2 + $0x1c] sm:$0xf]
    %v520 = vmul.f32 %v506, %v506
    %v521 = vmul.f32 %v509, %v509
    %v522 = vmul.f32 %v506, %v509
    %v523 = vpack.c.bf16 %v509, %v506
    %v524 = vpack.c.bf16 %v521, %v520
    %v525 = vpack.c.bf16 %v522, %v522
    %v534 = vunpack.c.l.b16 %v512
    %v535 = vunpack.c.l.b16 %v513
    %v536 = vunpack.c.l.b16 %v514
    %v537 = vunpack.c.l.b16 %v515
    %v538 = vunpack.c.l.b16 %v516
    %v539 = vunpack.c.l.b16 %v517
    %v540 = vunpack.c.l.b16 %v518
    %v541 = vunpack.c.l.b16 %v519
    %v542 = vpack.c.b16 %v535, %v534
    %v543 = vpack.c.b16 %v537, %v536
    %v544 = vpack.c.b16 %v539, %v538
    %v545 = vpack.c.b16 %v541, %v540
    %vm550 = vcmask 523264
    %v552 = vsel %vm550, %v523, 0
    %v555 = vsel %vm550, %v524, 0
    %v558 = vsel %vm550, %v525, 0
    %560 = vmatprep.subr.bf16.mxu0 0
    %561 = vmatpush1.bf16.msra.mxu0 %v542
    %562 = vmatprep.subr.bf16.mxu0 0
    %563 = vmatpush1.bf16.msra.mxu0 %v543
    %564 = vmatprep.subr.bf16.mxu0 0
    %565 = vmatpush1.bf16.msra.mxu0 %v544
    %566 = vmatprep.subr.bf16.mxu0 0
    %567 = vmatpush1.bf16.msra.mxu0 %v545
    %568 = vmatprep.subr.bf16.mxu0 0
    %569 = vmatpush1.bf16.msra.mxu0 0
    %570 = vmatprep.subr.bf16.mxu0 0
    %571 = vmatpush1.bf16.msra.mxu0 0
    %572 = vmatprep.subr.bf16.mxu0 0
    %573 = vmatpush1.bf16.msra.mxu0 0
    %574 = vmatprep.subr.bf16.mxu0 0
    %575 = vmatpush1.bf16.msra.mxu0 0
    %576 = vmatprep.subr.bf16.mxu0 0
    %577 = vmatpush1.bf16.msra.mxu0 0
    %578 = vmatprep.subr.bf16.mxu0 0
    %579 = vmatpush1.bf16.msra.mxu0 0
    %580 = vmatprep.subr.bf16.mxu0 0
    %581 = vmatpush1.bf16.msra.mxu0 0
    %582 = vmatprep.subr.bf16.mxu0 0
    %583 = vmatpush1.bf16.msra.mxu0 0
    %584 = vmatprep.subr.bf16.mxu0 0
    %585 = vmatpush1.bf16.msra.mxu0 0
    %586 = vmatprep.subr.bf16.mxu0 0
    %587 = vmatpush1.bf16.msra.mxu0 0
    %588 = vmatprep.subr.bf16.mxu0 0
    %589 = vmatpush1.bf16.msra.mxu0 0
    %590 = vmatprep.subr.bf16.mxu0 0
    %591 = vmatpush1.bf16.msra.mxu0 0
    %592 = vmatprep.mubr.bf16.mxu0 0
    %593 = vmatmul.mubr.bf16.gmra.mrb[0].mxu0 %v552
    %v594 = vpop.f32.mrb[0].mxu0
    %v595 = vadd.f32 0.0, %v594
    %v596 = vpop.f32.mrb[0].mxu0
    %v597 = vpop.f32.mrb[0].mxu0
    %v598 = vadd.f32 0.0, %v597
    %v599 = vpop.f32.mrb[0].mxu0
    %600 = vmatprep.mubr.bf16.mxu0 0
    %601 = vmatmul.mubr.bf16.gmra.mrb[0].mxu0 %v555
    %v602 = vpop.f32.mrb[0].mxu0
    %v603 = vadd.f32 0.0, %v602
    %v604 = vpop.f32.mrb[0].mxu0
    %v605 = vpop.f32.mrb[0].mxu0
    %v606 = vadd.f32 0.0, %v605
    %v607 = vpop.f32.mrb[0].mxu0
    %608 = vmatprep.mubr.bf16.mxu0 0
    %609 = vmatmul.mubr.bf16.gmra.mrb[0].mxu0 %v558
    %v610 = vpop.f32.mrb[0].mxu0
    %v611 = vadd.f32 0.0, %v610
    %v612 = vpop.f32.mrb[0].mxu0
    %v613 = vpop.f32.mrb[0].mxu0
    %v614 = vpop.f32.mrb[0].mxu0
    %615 = vdwg.mxu0
    %v616 = vmul.f32 %v595, %v595
    %v617 = vmul.f32 %v598, %v598
    %v618 = vmul.f32 %v595, %v598
    %v619 = vsub.f32 %v603, %v616
    %v620 = vsub.f32 %v606, %v617
    %v621 = vsub.f32 %v611, %v618
    %v622 = vmul.f32 %v621, 2.0
    %v623 = vadd.f32 %v622, 0.0009
    %v624 = vadd.f32 %v619, %v620
    %v625 = vadd.f32 %v624, 0.0009
    %v626 = vrcp.pop %v625
    %v627 = vmul.f32 %v623, %v626
    %v628 = vmul.f32 %v627, %v328
    %v629 = vsel %vm550, %v628, 0.0
    %630 = vadd.xlane.f32.xlu0 %v629
    %v631 = vpop.xlane.xlu0 %630
    %v632 = vrot.slane %v631, 4
    %v633 = vadd.f32 %v631, %v632
    %v634 = vrot.slane %v633, 2
    %v635 = vadd.f32 %v633, %v634
    %v636 = vrot.slane %v635, 1
    %v637 = vadd.f32 %v635, %v636
    %s638 = vtos %v637
    %s639 = smul.f32 %s638, 0.0026041667
    %v640 = vstv %s639
    %v641 = vld [vmem:[%s6] sm:$0xf]
    %v642 = vld [vmem:[%s6 + $0x4] sm:$0xf]
    %v643 = vld [vmem:[%s6 + $0x8] sm:$0xf]
    %v644 = vld [vmem:[%s6 + $0xc] sm:$0xf]
    %v645 = vld [vmem:[%s6 + $0x10] sm:$0xf]
    %v646 = vld [vmem:[%s6 + $0x14] sm:$0xf]
    %v647 = vld [vmem:[%s6 + $0x18] sm:$0xf]
    %v648 = vld [vmem:[%s6 + $0x1c] sm:$0xf]
    %v657 = vunpack.c.l.b16 %v641
    %v658 = vunpack.c.l.b16 %v642
    %v659 = vunpack.c.l.b16 %v643
    %v660 = vunpack.c.l.b16 %v644
    %v661 = vunpack.c.l.b16 %v645
    %v662 = vunpack.c.l.b16 %v646
    %v663 = vunpack.c.l.b16 %v647
    %v664 = vunpack.c.l.b16 %v648
    %v665 = vpack.c.b16 %v658, %v657
    %v666 = vpack.c.b16 %v660, %v659
    %v667 = vpack.c.b16 %v662, %v661
    %v668 = vpack.c.b16 %v664, %v663
    %673 = vmatprep.subr.bf16.mxu0 0
    %674 = vmatpush1.bf16.msra.mxu0 %v665
    %675 = vmatprep.subr.bf16.mxu0 0
    %676 = vmatpush1.bf16.msra.mxu0 %v666
    %677 = vmatprep.subr.bf16.mxu0 0
    %678 = vmatpush1.bf16.msra.mxu0 %v667
    %679 = vmatprep.subr.bf16.mxu0 0
    %680 = vmatpush1.bf16.msra.mxu0 %v668
    %681 = vmatprep.subr.bf16.mxu0 0
    %682 = vmatpush1.bf16.msra.mxu0 0
    %683 = vmatprep.subr.bf16.mxu0 0
    %684 = vmatpush1.bf16.msra.mxu0 0
    %685 = vmatprep.subr.bf16.mxu0 0
    %686 = vmatpush1.bf16.msra.mxu0 0
    %687 = vmatprep.subr.bf16.mxu0 0
    %688 = vmatpush1.bf16.msra.mxu0 0
    %689 = vmatprep.subr.bf16.mxu0 0
    %690 = vmatpush1.bf16.msra.mxu0 0
    %691 = vmatprep.subr.bf16.mxu0 0
    %692 = vmatpush1.bf16.msra.mxu0 0
    %693 = vmatprep.subr.bf16.mxu0 0
    %694 = vmatpush1.bf16.msra.mxu0 0
    %695 = vmatprep.subr.bf16.mxu0 0
    %696 = vmatpush1.bf16.msra.mxu0 0
    %697 = vmatprep.subr.bf16.mxu0 0
    %698 = vmatpush1.bf16.msra.mxu0 0
    %699 = vmatprep.subr.bf16.mxu0 0
    %700 = vmatpush1.bf16.msra.mxu0 0
    %701 = vmatprep.subr.bf16.mxu0 0
    %702 = vmatpush1.bf16.msra.mxu0 0
    %703 = vmatprep.subr.bf16.mxu0 0
    %704 = vmatpush1.bf16.msra.mxu0 0
    %705 = vmatprep.mubr.bf16.mxu0 0
    %706 = vmatmul.mubr.bf16.gmra.mrb[0].mxu0 %v552
    %v707 = vpop.f32.mrb[0].mxu0
    %v708 = vadd.f32 0.0, %v707
    %v709 = vpop.f32.mrb[0].mxu0
    %v710 = vpop.f32.mrb[0].mxu0
    %v711 = vadd.f32 0.0, %v710
    %v712 = vpop.f32.mrb[0].mxu0
    %713 = vdwg.mxu0
    %v714 = vld [vmem:[%s3] sm:$0xf]
    %v715 = vld [vmem:[%s3 + $0x4] sm:$0xf]
    %v716 = vmul.f32 %v708, %v708
    %v717 = vmul.f32 %v711, %v711
    %v718 = vmul.f32 %v708, %v711
    %v719 = vpack.c.bf16 %v711, %v708
    %v720 = vpack.c.bf16 %v717, %v716
    %v721 = vpack.c.bf16 %v718, %v718
    %v724 = vunpack.c.l.b16 %v714
    %v725 = vunpack.c.l.b16 %v715
    %v726 = vpack.c.b16 %v725, %v724
    %vm728 = vcmask 130048
    %v730 = vsel %vm728, %v719, 0
    %v733 = vsel %vm728, %v720, 0
    %v736 = vsel %vm728, %v721, 0
    %738 = vmatprep.subr.bf16.mxu0 0
    %739 = vmatpush1.bf16.msra.mxu0 %v726
    %740 = vmatprep.subr.bf16.mxu0 0
    %741 = vmatpush1.bf16.msra.mxu0 0
    %742 = vmatprep.subr.bf16.mxu0 0
    %743 = vmatpush1.bf16.msra.mxu0 0
    %744 = vmatprep.subr.bf16.mxu0 0
    %745 = vmatpush1.bf16.msra.mxu0 0
    %746 = vmatprep.subr.bf16.mxu0 0
    %747 = vmatpush1.bf16.msra.mxu0 0
    %748 = vmatprep.subr.bf16.mxu0 0
    %749 = vmatpush1.bf16.msra.mxu0 0
    %750 = vmatprep.subr.bf16.mxu0 0
    %751 = vmatpush1.bf16.msra.mxu0 0
    %752 = vmatprep.subr.bf16.mxu0 0
    %753 = vmatpush1.bf16.msra.mxu0 0
    %754 = vmatprep.subr.bf16.mxu0 0
    %755 = vmatpush1.bf16.msra.mxu0 0
    %756 = vmatprep.subr.bf16.mxu0 0
    %757 = vmatpush1.bf16.msra.mxu0 0
    %758 = vmatprep.subr.bf16.mxu0 0
    %759 = vmatpush1.bf16.msra.mxu0 0
    %760 = vmatprep.subr.bf16.mxu0 0
    %761 = vmatpush1.bf16.msra.mxu0 0
    %762 = vmatprep.subr.bf16.mxu0 0
    %763 = vmatpush1.bf16.msra.mxu0 0
    %764 = vmatprep.subr.bf16.mxu0 0
    %765 = vmatpush1.bf16.msra.mxu0 0
    %766 = vmatprep.subr.bf16.mxu0 0
    %767 = vmatpush1.bf16.msra.mxu0 0
    %768 = vmatprep.subr.bf16.mxu0 0
    %769 = vmatpush1.bf16.msra.mxu0 0
    %770 = vmatprep.mubr.bf16.mxu0 0
    %771 = vmatmul.mubr.bf16.gmra.mrb[0].mxu0 %v730
    %v772 = vpop.f32.mrb[0].mxu0
    %v773 = vadd.f32 0.0, %v772
    %v774 = vpop.f32.mrb[0].mxu0
    %v775 = vpop.f32.mrb[0].mxu0
    %v776 = vadd.f32 0.0, %v775
    %v777 = vpop.f32.mrb[0].mxu0
    %778 = vmatprep.mubr.bf16.mxu0 0
    %779 = vmatmul.mubr.bf16.gmra.mrb[0].mxu0 %v733
    %v780 = vpop.f32.mrb[0].mxu0
    %v781 = vadd.f32 0.0, %v780
    %v782 = vpop.f32.mrb[0].mxu0
    %v783 = vpop.f32.mrb[0].mxu0
    %v784 = vadd.f32 0.0, %v783
    %v785 = vpop.f32.mrb[0].mxu0
    %786 = vmatprep.mubr.bf16.mxu0 0
    %787 = vmatmul.mubr.bf16.gmra.mrb[0].mxu0 %v736
    %v788 = vpop.f32.mrb[0].mxu0
    %v789 = vadd.f32 0.0, %v788
    %v790 = vpop.f32.mrb[0].mxu0
    %v791 = vpop.f32.mrb[0].mxu0
    %v792 = vpop.f32.mrb[0].mxu0
    %793 = vdwg.mxu0
    %v794 = vmul.f32 %v773, %v773
    %v795 = vmul.f32 %v776, %v776
    %v796 = vmul.f32 %v773, %v776
    %v797 = vsub.f32 %v781, %v794
    %v798 = vsub.f32 %v784, %v795
    %v799 = vsub.f32 %v789, %v796
    %v800 = vmul.f32 %v799, 2.0
    %v801 = vadd.f32 %v800, 0.0009
    %v802 = vadd.f32 %v797, %v798
    %v803 = vadd.f32 %v802, 0.0009
    %v804 = vrcp.pop %v803
    %v805 = vmul.f32 %v801, %v804
    %v806 = vmul.f32 %v805, %v328
    %v807 = vsel %vm728, %v806, 0.0
    %808 = vadd.xlane.f32.xlu0 %v807
    %v809 = vpop.xlane.xlu0 %808
    %v810 = vrot.slane %v809, 4
    %v811 = vadd.f32 %v809, %v810
    %v812 = vrot.slane %v811, 2
    %v813 = vadd.f32 %v811, %v812
    %v814 = vrot.slane %v813, 1
    %v815 = vadd.f32 %v813, %v814
    %s816 = vtos %v815
    %s817 = smul.f32 %s816, 0.010416667
    %v818 = vstv %s817
    %v819 = vld [vmem:[%s7] sm:$0xf]
    %v820 = vld [vmem:[%s7 + $0x4] sm:$0xf]
    %v823 = vunpack.c.l.b16 %v819
    %v824 = vunpack.c.l.b16 %v820
    %v825 = vpack.c.b16 %v824, %v823
    %827 = vmatprep.subr.bf16.mxu0 0
    %828 = vmatpush1.bf16.msra.mxu0 %v825
    %829 = vmatprep.subr.bf16.mxu0 0
    %830 = vmatpush1.bf16.msra.mxu0 0
    %831 = vmatprep.subr.bf16.mxu0 0
    %832 = vmatpush1.bf16.msra.mxu0 0
    %833 = vmatprep.subr.bf16.mxu0 0
    %834 = vmatpush1.bf16.msra.mxu0 0
    %835 = vmatprep.subr.bf16.mxu0 0
    %836 = vmatpush1.bf16.msra.mxu0 0
    %837 = vmatprep.subr.bf16.mxu0 0
    %838 = vmatpush1.bf16.msra.mxu0 0
    %839 = vmatprep.subr.bf16.mxu0 0
    %840 = vmatpush1.bf16.msra.mxu0 0
    %841 = vmatprep.subr.bf16.mxu0 0
    %842 = vmatpush1.bf16.msra.mxu0 0
    %843 = vmatprep.subr.bf16.mxu0 0
    %844 = vmatpush1.bf16.msra.mxu0 0
    %845 = vmatprep.subr.bf16.mxu0 0
    %846 = vmatpush1.bf16.msra.mxu0 0
    %847 = vmatprep.subr.bf16.mxu0 0
    %848 = vmatpush1.bf16.msra.mxu0 0
    %849 = vmatprep.subr.bf16.mxu0 0
    %850 = vmatpush1.bf16.msra.mxu0 0
    %851 = vmatprep.subr.bf16.mxu0 0
    %852 = vmatpush1.bf16.msra.mxu0 0
    %853 = vmatprep.subr.bf16.mxu0 0
    %854 = vmatpush1.bf16.msra.mxu0 0
    %855 = vmatprep.subr.bf16.mxu0 0
    %856 = vmatpush1.bf16.msra.mxu0 0
    %857 = vmatprep.subr.bf16.mxu0 0
    %858 = vmatpush1.bf16.msra.mxu0 0
    %859 = vmatprep.mubr.bf16.mxu0 0
    %860 = vmatmul.mubr.bf16.gmra.mrb[0].mxu0 %v730
    %v861 = vpop.f32.mrb[0].mxu0
    %v862 = vadd.f32 0.0, %v861
    %v863 = vpop.f32.mrb[0].mxu0
    %v864 = vpop.f32.mrb[0].mxu0
    %v865 = vadd.f32 0.0, %v864
    %v866 = vpop.f32.mrb[0].mxu0
    %867 = vdwg.mxu0
    %v868 = vld [vmem:[%s4] sm:$0x3]
    %v869 = vmul.f32 %v862, %v862
    %v870 = vmul.f32 %v865, %v865
    %v871 = vmul.f32 %v862, %v865
    %v872 = vpack.c.bf16 %v865, %v862
    %v873 = vpack.c.bf16 %v870, %v869
    %v874 = vpack.c.bf16 %v871, %v871
    %vm875 = vcmask 31744
    %v877 = vsel %vm875, %v872, 0
    %v880 = vsel %vm875, %v873, 0
    %v883 = vsel %vm875, %v874, 0
    %vm885 = vcmask 1041408
    %v887 = vsel %vm885, %v868, 0
    %889 = vmatprep.subr.bf16.mxu0 0
    %890 = vmatpush1.bf16.msra.mxu0 %v887
    %891 = vmatprep.subr.bf16.mxu0 0
    %892 = vmatpush1.bf16.msra.mxu0 0
    %893 = vmatprep.subr.bf16.mxu0 0
    %894 = vmatpush1.bf16.msra.mxu0 0
    %895 = vmatprep.subr.bf16.mxu0 0
    %896 = vmatpush1.bf16.msra.mxu0 0
    %897 = vmatprep.subr.bf16.mxu0 0
    %898 = vmatpush1.bf16.msra.mxu0 0
    %899 = vmatprep.subr.bf16.mxu0 0
    %900 = vmatpush1.bf16.msra.mxu0 0
    %901 = vmatprep.subr.bf16.mxu0 0
    %902 = vmatpush1.bf16.msra.mxu0 0
    %903 = vmatprep.subr.bf16.mxu0 0
    %904 = vmatpush1.bf16.msra.mxu0 0
    %905 = vmatprep.subr.bf16.mxu0 0
    %906 = vmatpush1.bf16.msra.mxu0 0
    %907 = vmatprep.subr.bf16.mxu0 0
    %908 = vmatpush1.bf16.msra.mxu0 0
    %909 = vmatprep.subr.bf16.mxu0 0
    %910 = vmatpush1.bf16.msra.mxu0 0
    %911 = vmatprep.subr.bf16.mxu0 0
    %912 = vmatpush1.bf16.msra.mxu0 0
    %913 = vmatprep.subr.bf16.mxu0 0
    %914 = vmatpush1.bf16.msra.mxu0 0
    %915 = vmatprep.subr.bf16.mxu0 0
    %916 = vmatpush1.bf16.msra.mxu0 0
    %917 = vmatprep.subr.bf16.mxu0 0
    %918 = vmatpush1.bf16.msra.mxu0 0
    %919 = vmatprep.subr.bf16.mxu0 0
    %920 = vmatpush1.bf16.msra.mxu0 0
    %921 = vmatprep.mubr.bf16.mxu0 0
    %922 = vmatmul.mubr.bf16.gmra.mrb[0].mxu0 %v877
    %v923 = vpop.f32.mrb[0].mxu0
    %v924 = vadd.f32 0.0, %v923
    %v925 = vpop.f32.mrb[0].mxu0
    %v926 = vpop.f32.mrb[0].mxu0
    %v927 = vadd.f32 0.0, %v926
    %v928 = vpop.f32.mrb[0].mxu0
    %929 = vmatprep.mubr.bf16.mxu0 0
    %930 = vmatmul.mubr.bf16.gmra.mrb[0].mxu0 %v880
    %v931 = vpop.f32.mrb[0].mxu0
    %v932 = vadd.f32 0.0, %v931
    %v933 = vpop.f32.mrb[0].mxu0
    %v934 = vpop.f32.mrb[0].mxu0
    %v935 = vadd.f32 0.0, %v934
    %v936 = vpop.f32.mrb[0].mxu0
    %937 = vmatprep.mubr.bf16.mxu0 0
    %938 = vmatmul.mubr.bf16.gmra.mrb[0].mxu0 %v883
    %v939 = vpop.f32.mrb[0].mxu0
    %v940 = vadd.f32 0.0, %v939
    %v941 = vpop.f32.mrb[0].mxu0
    %v942 = vpop.f32.mrb[0].mxu0
    %v943 = vpop.f32.mrb[0].mxu0
    %944 = vdwg.mxu0
    %v945 = vmul.f32 %v924, %v924
    %v946 = vmul.f32 %v927, %v927
    %v947 = vmul.f32 %v924, %v927
    %v948 = vsub.f32 %v932, %v945
    %v949 = vsub.f32 %v935, %v946
    %v950 = vsub.f32 %v940, %v947
    %v951 = vmul.f32 %v950, 2.0
    %v952 = vadd.f32 %v951, 0.0009
    %v953 = vadd.f32 %v948, %v949
    %v954 = vadd.f32 %v953, 0.0009
    %v955 = vrcp.pop %v954
    %v956 = vmul.f32 %v952, %v955
    %v957 = vmul.f32 %v956, %v328
    %v958 = vsel %vm875, %v957, 0.0
    %959 = vadd.xlane.f32.xlu0 %v958
    %v960 = vpop.xlane.xlu0 %959
    %v961 = vrot.slane %v960, 4
    %v962 = vadd.f32 %v960, %v961
    %v963 = vrot.slane %v962, 2
    %v964 = vadd.f32 %v962, %v963
    %v965 = vrot.slane %v964, 1
    %v966 = vadd.f32 %v964, %v965
    %s967 = vtos %v966
    %s968 = smul.f32 %s967, 0.041666668
    %v969 = vstv %s968
    %v970 = vsel %vm875, %v862, 0.0
    %971 = vadd.xlane.f32.xlu0 %v970
    %v972 = vpop.xlane.xlu0 %971
    %v973 = vsel %vm875, %v865, 0.0
    %974 = vadd.xlane.f32.xlu0 %v973
    %v975 = vpop.xlane.xlu0 %974
    %v976 = vmul.f32 %v972, 0.25
    %v977 = vmul.f32 %v975, 0.25
    %v978 = vmul.f32 %v976, 2.6830805e-06
    %v979 = vmul.f32 %v977, 2.6830805e-06
    %v980 = vmul.f32 %v976, %v976
    %v981 = vmul.f32 %v980, 2.6830805e-06
    %v982 = vmul.f32 %v977, %v977
    %v983 = vmul.f32 %v982, 2.6830805e-06
    %v984 = vmul.f32 %v976, %v977
    %v985 = vmul.f32 %v984, 2.6830805e-06
    %v986 = vmul.f32 %v978, %v978
    %v987 = vmul.f32 %v979, %v979
    %v988 = vmul.f32 %v978, %v979
    %v989 = vsub.f32 %v981, %v986
    %v990 = vsub.f32 %v983, %v987
    %v991 = vsub.f32 %v985, %v988
    %v992 = vmul.f32 %v991, 2.0
    %v993 = vadd.f32 %v992, 0.0009
    %v994 = vadd.f32 %v989, %v990
    %v995 = vadd.f32 %v994, 0.0009
    %v996 = vrcp.pop %v995
    %v997 = vmul.f32 %v993, %v996
    %v998 = vmul.f32 %v988, 2.0
    %v999 = vadd.f32 %v998, 0.0001
    %v1000 = vadd.f32 %v986, %v987
    %v1001 = vadd.f32 %v1000, 0.0001
    %v1002 = vrcp.pop %v1001
    %v1003 = vmul.f32 %v999, %v1002
    %v1004 = vmul.f32 %v1003, %v997
    %v1005 = vmul.f32 %v1004, %v328
    %vm1006 = vcmask 7168
    %v1007 = vsel %vm1006, %v1005, 0.0
    %1008 = vadd.xlane.f32.xlu0 %v1007
    %v1009 = vpop.xlane.xlu0 %1008
    %v1010 = vrot.slane %v1009, 4
    %v1011 = vadd.f32 %v1009, %v1010
    %v1012 = vrot.slane %v1011, 2
    %v1013 = vadd.f32 %v1011, %v1012
    %v1014 = vrot.slane %v1013, 1
    %v1015 = vadd.f32 %v1013, %v1014
    %s1016 = vtos %v1015
    %s1017 = smul.f32 %s1016, 0.16666667
    %v1018 = vstv %s1017
    %v1019 = vlog2.pop %v342
    %v1020 = vmul.f32 %v1019, 0.6931472
    %v1021 = vmul.f32 %v1020, 0.0448
    %v1022 = vmul.f32 %v1021, 1.442695
    %v1023 = vpow.pop %v1022
    %v1024 = vlog2.pop %v640
    %v1025 = vmul.f32 %v1024, 0.6931472
    %v1026 = vmul.f32 %v1025, 0.2856
    %v1027 = vmul.f32 %v1026, 1.442695
    %v1028 = vpow.pop %v1027
    %v1029 = vmul.f32 %v1023, %v1028
    %v1030 = vlog2.pop %v818
    %v1031 = vmul.f32 %v1030, 0.6931472
    %v1032 = vmul.f32 %v1031, 0.3001
    %v1033 = vmul.f32 %v1032, 1.442695
    %v1034 = vpow.pop %v1033
    %v1035 = vmul.f32 %v1029, %v1034
    %v1036 = vlog2.pop %v969
    %v1037 = vmul.f32 %v1036, 0.6931472
    %v1038 = vmul.f32 %v1037, 0.2363
    %v1039 = vmul.f32 %v1038, 1.442695
    %v1040 = vpow.pop %v1039
    %v1041 = vmul.f32 %v1035, %v1040
    %v1042 = vlog2.pop %v1018
    %v1043 = vmul.f32 %v1042, 0.6931472
    %v1044 = vmul.f32 %v1043, 0.5332
    %v1045 = vmul.f32 %v1044, 1.442695
    %v1046 = vpow.pop %v1045
    %v1047 = vmul.f32 %v1041, %v1046
    %v1048 = vsub.f32 1.0, %v1047
    %vm1049 = vcmask 0
    %1050 = vst.msk [vmem:[#allocation2] sm:$0x1] %vm1049, %v1048
    // Predicated region
    $region34: #{forward.1} parent=1 // pred_check
      _
    $region35: #{forward.1} parent=1 // pred_check_branch
      %1052 = sbr.rel (0) target = $region37
    $region36: #{forward.1} parent=1 // pred_region
      %s1054 = ssub.s32 16, 16
      %1055 = vsyncadd [#allocation3], %s1054
      %s1057 = sshll.u32 [#allocation2], 4
      %s1058 = int_to_ptr.vmem [resolvable:$true] %s1057
      %1060 = dma.vmem_to_hbm [thread:$0]  %s1058, 16, %s8, [#allocation3]
    $region37: #{forward.1} parent=1 // pred_fallthru
      _
    // Predicated region
    $region38: #{forward.1} parent=1 // pred_check
      _
    $region39: #{forward.1} parent=1 // pred_check_branch
      %1062 = sbr.rel (0) target = $region41
    $region40: #{forward.1} parent=1 // pred_region
      %1063 = dma.done [#allocation3], 16
    $region41: #{forward.1} parent=1 // pred_fallthru
      _
    %1064 = vsyncpa [#allocation3], 1

</llo_original>
